<compile_context>
chip_gen: v7x
topology: tpu7x:2x2x1
jax: 0.10.0
libtpu: 0.0.40
codegen_flags: <defaults>
</compile_context>

<pallas_src>
import functools

import jax
import jax.numpy as jnp
from jax.experimental import pallas as pl
from jax.experimental.pallas import tpu as pltpu


# --------------------------------------------------------------------------
# Kernels
# --------------------------------------------------------------------------
def _layernorm_kernel(x_ref, scale_ref, shift_ref, o_ref, *, eps: float):
    """Plain path: one LayerNorm row per block row.  x_ref: (tile_rows, d)."""
    x = x_ref[...].astype(jnp.float32)
    d = x.shape[-1]

    mean = jnp.mean(x, axis=-1, keepdims=True)
    diff = x - mean
    # torch.Tensor.std() defaults to unbiased (Bessel's correction).
    denom = d - 1 if d > 1 else 1  # guard d==1 (torch would give NaN)
    var = jnp.sum(diff * diff, axis=-1, keepdims=True) * jnp.float32(1.0 / denom)
    std = jnp.sqrt(var)

    # Exact divide: one per row, negligible cost in an HBM-bound kernel,
    # and it matches PyTorch's exact division (the approx reciprocal was the
    # source of the previous correctness failure).
    inv = 1.0 / (std + jnp.float32(eps))

    scale = scale_ref[...].astype(jnp.float32)
    shift = shift_ref[...].astype(jnp.float32)
    y = (diff * inv) * scale + shift
    o_ref[...] = y.astype(o_ref.dtype)


def _layernorm_folded_kernel(x_ref, scale_ref, shift_ref, o_ref, *,
                             eps: float, d_model: int, k: int):
    """Lane-folded path: k LayerNorm rows packed into one 128-wide block row.

    x_ref: (tile_rows, k * d_model) with k * d_model == 128, so loads/stores
    are lane-dense.  Each d_model-wide lane segment is normalized independently
    with exact math (static lane slices + concat, no MXU, no reshape).
    """
    x = x_ref[...].astype(jnp.float32)              # (T, k*d)
    scale = scale_ref[...].astype(jnp.float32)      # (1, d)
    shift = shift_ref[...].astype(jnp.float32)      # (1, d)
    denom = d_model - 1 if d_model > 1 else 1
    inv_denom = jnp.float32(1.0 / denom)
    eps_f = jnp.float32(eps)

    outs = []
    for j in range(k):                              # k <= 16, unrolled
        xj = x[:, j * d_model:(j + 1) * d_model]    # (T, d)
        mean = jnp.mean(xj, axis=-1, keepdims=True)
        diff = xj - mean
        var = jnp.sum(diff * diff, axis=-1, keepdims=True) * inv_denom
        inv = 1.0 / (jnp.sqrt(var) + eps_f)
        outs.append((diff * inv) * scale + shift)

    o_ref[...] = jnp.concatenate(outs, axis=-1).astype(o_ref.dtype)


# --------------------------------------------------------------------------
# Tiling helpers
# --------------------------------------------------------------------------
def _tpu_vmem_capacity_bytes() -> int:
    """Generation-aware VMEM capacity; conservative v7x default if unknown."""
    try:
        return int(pltpu.get_tpu_info().vmem_capacity_bytes)
    except Exception:
        return 64 * 1024 * 1024  # v7x per-TC -- the smallest of v5e/v6e/v7x


def _choose_tile_rows(rows: int, row_width: int, in_bytes: int, out_bytes: int,
                      vmem_capacity: int) -> int:
    """Largest row tile that (a) hits a ~4 MiB-per-block DMA target and
    (b) fits a conservative, generation-aware VMEM working-set budget.

    Per block row we account for: 2x double-buffered input + 2x double-buffered
    output (BlockSpec pipelining) + ~24 B/element of live f32 temporaries
    (x, diff, diff*diff, y, broadcast scale/shift).
    """
    per_row_bytes = row_width * (2 * (in_bytes + out_bytes) + 24)
    budget = int(vmem_capacity * 0.40)          # headroom for compiler scratch
    t_budget = budget // max(per_row_bytes, 1)

    # Bytes-per-block target so narrow rows still get big blocks and the
    # ~0.35 us per-grid-step overhead is amortized (matters most on v7x).
    target_block_bytes = 4 * 1024 * 1024
    t_target = target_block_bytes // max(row_width * in_bytes, 1)

    t = max(8, min(t_budget, t_target))
    t = (t // 8) * 8                            # sublane multiple
    if rows <= t:
        return rows                             # single block == full dim: always legal
    return t


# --------------------------------------------------------------------------
# Wrapper
# --------------------------------------------------------------------------
def layer_normalization(x, scale, shift, eps: float, *,
                        tile_rows: int | None = None, fold_lanes: bool = True):
    """x: (..., d_model); scale/shift: (d_model,).  Returns same shape/dtype as x."""
    orig_shape = x.shape
    d_model = orig_shape[-1]
    rows = 1
    for s in orig_shape[:-1]:
        rows *= s

    x2 = x.reshape(rows, d_model)
    scale2 = scale.reshape(1, d_model)
    shift2 = shift.reshape(1, d_model)

    in_bytes = jnp.dtype(x.dtype).itemsize
    vmem_cap = _tpu_vmem_capacity_bytes()

    # Lane folding: pack k rows into a 128-wide last dim so HBM<->VMEM DMAs and
    # stores are lane-dense (the documented biggest lever for narrow last dims).
    use_fold = (fold_lanes and 8 <= d_model < 128 and 128 % d_model == 0
                and rows % (128 // d_model) == 0)

    if use_fold:
        k = 128 // d_model
        n_rows = rows // k
        width = k * d_model                              # == 128
        x_in = x2.reshape(n_rows, width)                 # metadata-only reshape
        kernel = functools.partial(_layernorm_folded_kernel,
                                   eps=float(eps), d_model=d_model, k=k)
    else:
        n_rows, width = rows, d_model
        x_in = x2
        kernel = functools.partial(_layernorm_kernel, eps=float(eps))

    if tile_rows is None:
        tr = _choose_tile_rows(n_rows, width, in_bytes, in_bytes, vmem_cap)
    else:
        tr = max(1, min(int(tile_rows), n_rows))

    out = pl.pallas_call(
        kernel,
        out_shape=jax.ShapeDtypeStruct((n_rows, width), x.dtype),
        grid_spec=pltpu.PrefetchScalarGridSpec(
            num_scalar_prefetch=0,
            # Ragged trailing block instead of wrapper-side pad+slice: rows are
            # independent, OOB reads feed garbage rows whose stores are masked.
            grid=(pl.cdiv(n_rows, tr),),
            in_specs=[
                pl.BlockSpec((tr, width), lambda i: (i, 0)),
                # Constant block index -> fetched once, stays resident in VMEM.
                pl.BlockSpec((1, d_model), lambda i: (0, 0)),
                pl.BlockSpec((1, d_model), lambda i: (0, 0)),
            ],
            out_specs=pl.BlockSpec((tr, width), lambda i: (i, 0)),
        ),
        compiler_params=pltpu.CompilerParams(
            dimension_semantics=("parallel",),        # row axis shards across v7x's 2 TCs
            vmem_limit_bytes=int(vmem_cap * 0.70),    # generation-aware, with headroom
        ),
    )(x_in, scale2, shift2)

    return out.reshape(orig_shape)


# --------------------------------------------------------------------------
# Demo / self-check
# --------------------------------------------------------------------------
if __name__ == "__main__":
    config = {"eps": 1e-5, "d_model": 32}

    # Deterministic parameter init (matches nn.Parameter(ones/zeros)).
    scale = jnp.ones((config["d_model"],), dtype=jnp.float32)
    shift = jnp.zeros((config["d_model"],), dtype=jnp.float32)

    # Small example input: (batch=2, seq=8, d_model=32)
    key = jax.random.PRNGKey(0)
    x = jax.random.normal(key, (2, 8, config["d_model"]), dtype=jnp.float32)

    y = layer_normalization(x, scale, shift, config["eps"])
    y = jax.block_until_ready(y)

    # Pure-JAX reference with the same unbiased-std + eps-outside-sqrt semantics
    # as the PyTorch module.  The kernel uses exact division, so tolerances are tight.
    mean = jnp.mean(x, axis=-1, keepdims=True)
    std = jnp.sqrt(jnp.sum((x - mean) ** 2, axis=-1, keepdims=True) / (x.shape[-1] - 1))
    ref = (x - mean) / (std + config["eps"]) * scale + shift
    assert jnp.allclose(y, ref, atol=1e-5, rtol=1e-5), "mismatch vs reference"

    print("KERNEL_OK")
</pallas_src>

<mosaic_0001>
module attributes {stable_mosaic.version = 11 : i64} {
  func.func @_layernorm_folded_kernel(%arg0: i32, %arg1: memref<4x128xf32, #tpu.memory_space<vmem>>, %arg2: memref<1x32xf32, #tpu.memory_space<vmem>>, %arg3: memref<1x32xf32, #tpu.memory_space<vmem>>, %arg4: memref<4x128xf32, #tpu.memory_space<vmem>>) attributes {dimension_semantics = [#tpu.dimension_semantics<parallel>], iteration_bounds = array<i64: 1>, scalar_prefetch = 0 : i64, scratch_operands = 0 : i64, tpu.core_type = #tpu.core_type<tc>, window_params = [{transform_indices = @transform_0, window_bounds = array<i64: 4, 128>}, {pipeline_mode = #tpu.pipeline_mode<synchronous>, transform_indices = @transform_1, window_bounds = array<i64: 1, 32>}, {pipeline_mode = #tpu.pipeline_mode<synchronous>, transform_indices = @transform_2, window_bounds = array<i64: 1, 32>}, {transform_indices = @transform_3, window_bounds = array<i64: 4, 128>}]} {
    %c0 = arith.constant 0 : index
    %c0_0 = arith.constant 0 : index
    %0 = vector.load %arg1[%c0, %c0_0] : memref<4x128xf32, #tpu.memory_space<vmem>>, vector<4x128xf32>
    %c0_1 = arith.constant 0 : index
    %c0_2 = arith.constant 0 : index
    %1 = vector.load %arg2[%c0_1, %c0_2] : memref<1x32xf32, #tpu.memory_space<vmem>>, vector<1x32xf32>
    %c0_3 = arith.constant 0 : index
    %c0_4 = arith.constant 0 : index
    %2 = vector.load %arg3[%c0_3, %c0_4] : memref<1x32xf32, #tpu.memory_space<vmem>>, vector<1x32xf32>
    %3 = vector.extract_strided_slice %0 {offsets = [0, 0], sizes = [4, 32], strides = [1, 1]} : vector<4x128xf32> to vector<4x32xf32>
    %cst = arith.constant dense<0.000000e+00> : vector<4xf32>
    %4 = vector.multi_reduction <add>, %3, %cst [1] : vector<4x32xf32> to vector<4xf32>
    %5 = vector.shape_cast %4 : vector<4xf32> to vector<4x1xf32>
    %cst_5 = arith.constant 3.200000e+01 : f32
    %6 = vector.broadcast %cst_5 : f32 to vector<4x1xf32>
    %7 = arith.divf %5, %6 : vector<4x1xf32>
    %8 = vector.broadcast %7 : vector<4x1xf32> to vector<4x32xf32>
    %9 = arith.subf %3, %8 : vector<4x32xf32>
    %10 = arith.mulf %9, %9 : vector<4x32xf32>
    %cst_6 = arith.constant dense<0.000000e+00> : vector<4xf32>
    %11 = vector.multi_reduction <add>, %10, %cst_6 [1] : vector<4x32xf32> to vector<4xf32>
    %12 = vector.shape_cast %11 : vector<4xf32> to vector<4x1xf32>
    %cst_7 = arith.constant 0.0322580636 : f32
    %13 = vector.broadcast %cst_7 : f32 to vector<4x1xf32>
    %14 = arith.mulf %12, %13 : vector<4x1xf32>
    %15 = math.sqrt %14 : vector<4x1xf32>
    %cst_8 = arith.constant 9.99999974E-6 : f32
    %16 = vector.broadcast %cst_8 : f32 to vector<4x1xf32>
    %17 = arith.addf %15, %16 : vector<4x1xf32>
    %cst_9 = arith.constant 1.000000e+00 : f32
    %18 = vector.broadcast %cst_9 : f32 to vector<4x1xf32>
    %19 = arith.divf %18, %17 : vector<4x1xf32>
    %20 = vector.broadcast %19 : vector<4x1xf32> to vector<4x32xf32>
    %21 = arith.mulf %9, %20 : vector<4x32xf32>
    %22 = vector.broadcast %1 : vector<1x32xf32> to vector<4x32xf32>
    %23 = arith.mulf %21, %22 : vector<4x32xf32>
    %24 = vector.broadcast %2 : vector<1x32xf32> to vector<4x32xf32>
    %25 = arith.addf %23, %24 : vector<4x32xf32>
    %26 = vector.extract_strided_slice %0 {offsets = [0, 32], sizes = [4, 32], strides = [1, 1]} : vector<4x128xf32> to vector<4x32xf32>
    %cst_10 = arith.constant dense<0.000000e+00> : vector<4xf32>
    %27 = vector.multi_reduction <add>, %26, %cst_10 [1] : vector<4x32xf32> to vector<4xf32>
    %28 = vector.shape_cast %27 : vector<4xf32> to vector<4x1xf32>
    %cst_11 = arith.constant 3.200000e+01 : f32
    %29 = vector.broadcast %cst_11 : f32 to vector<4x1xf32>
    %30 = arith.divf %28, %29 : vector<4x1xf32>
    %31 = vector.broadcast %30 : vector<4x1xf32> to vector<4x32xf32>
    %32 = arith.subf %26, %31 : vector<4x32xf32>
    %33 = arith.mulf %32, %32 : vector<4x32xf32>
    %cst_12 = arith.constant dense<0.000000e+00> : vector<4xf32>
    %34 = vector.multi_reduction <add>, %33, %cst_12 [1] : vector<4x32xf32> to vector<4xf32>
    %35 = vector.shape_cast %34 : vector<4xf32> to vector<4x1xf32>
    %cst_13 = arith.constant 0.0322580636 : f32
    %36 = vector.broadcast %cst_13 : f32 to vector<4x1xf32>
    %37 = arith.mulf %35, %36 : vector<4x1xf32>
    %38 = math.sqrt %37 : vector<4x1xf32>
    %cst_14 = arith.constant 9.99999974E-6 : f32
    %39 = vector.broadcast %cst_14 : f32 to vector<4x1xf32>
    %40 = arith.addf %38, %39 : vector<4x1xf32>
    %cst_15 = arith.constant 1.000000e+00 : f32
    %41 = vector.broadcast %cst_15 : f32 to vector<4x1xf32>
    %42 = arith.divf %41, %40 : vector<4x1xf32>
    %43 = vector.broadcast %42 : vector<4x1xf32> to vector<4x32xf32>
    %44 = arith.mulf %32, %43 : vector<4x32xf32>
    %45 = vector.broadcast %1 : vector<1x32xf32> to vector<4x32xf32>
    %46 = arith.mulf %44, %45 : vector<4x32xf32>
    %47 = vector.broadcast %2 : vector<1x32xf32> to vector<4x32xf32>
    %48 = arith.addf %46, %47 : vector<4x32xf32>
    %49 = vector.extract_strided_slice %0 {offsets = [0, 64], sizes = [4, 32], strides = [1, 1]} : vector<4x128xf32> to vector<4x32xf32>
    %cst_16 = arith.constant dense<0.000000e+00> : vector<4xf32>
    %50 = vector.multi_reduction <add>, %49, %cst_16 [1] : vector<4x32xf32> to vector<4xf32>
    %51 = vector.shape_cast %50 : vector<4xf32> to vector<4x1xf32>
    %cst_17 = arith.constant 3.200000e+01 : f32
    %52 = vector.broadcast %cst_17 : f32 to vector<4x1xf32>
    %53 = arith.divf %51, %52 : vector<4x1xf32>
    %54 = vector.broadcast %53 : vector<4x1xf32> to vector<4x32xf32>
    %55 = arith.subf %49, %54 : vector<4x32xf32>
    %56 = arith.mulf %55, %55 : vector<4x32xf32>
    %cst_18 = arith.constant dense<0.000000e+00> : vector<4xf32>
    %57 = vector.multi_reduction <add>, %56, %cst_18 [1] : vector<4x32xf32> to vector<4xf32>
    %58 = vector.shape_cast %57 : vector<4xf32> to vector<4x1xf32>
    %cst_19 = arith.constant 0.0322580636 : f32
    %59 = vector.broadcast %cst_19 : f32 to vector<4x1xf32>
    %60 = arith.mulf %58, %59 : vector<4x1xf32>
    %61 = math.sqrt %60 : vector<4x1xf32>
    %cst_20 = arith.constant 9.99999974E-6 : f32
    %62 = vector.broadcast %cst_20 : f32 to vector<4x1xf32>
    %63 = arith.addf %61, %62 : vector<4x1xf32>
    %cst_21 = arith.constant 1.000000e+00 : f32
    %64 = vector.broadcast %cst_21 : f32 to vector<4x1xf32>
    %65 = arith.divf %64, %63 : vector<4x1xf32>
    %66 = vector.broadcast %65 : vector<4x1xf32> to vector<4x32xf32>
    %67 = arith.mulf %55, %66 : vector<4x32xf32>
    %68 = vector.broadcast %1 : vector<1x32xf32> to vector<4x32xf32>
    %69 = arith.mulf %67, %68 : vector<4x32xf32>
    %70 = vector.broadcast %2 : vector<1x32xf32> to vector<4x32xf32>
    %71 = arith.addf %69, %70 : vector<4x32xf32>
    %72 = vector.extract_strided_slice %0 {offsets = [0, 96], sizes = [4, 32], strides = [1, 1]} : vector<4x128xf32> to vector<4x32xf32>
    %cst_22 = arith.constant dense<0.000000e+00> : vector<4xf32>
    %73 = vector.multi_reduction <add>, %72, %cst_22 [1] : vector<4x32xf32> to vector<4xf32>
    %74 = vector.shape_cast %73 : vector<4xf32> to vector<4x1xf32>
    %cst_23 = arith.constant 3.200000e+01 : f32
    %75 = vector.broadcast %cst_23 : f32 to vector<4x1xf32>
    %76 = arith.divf %74, %75 : vector<4x1xf32>
    %77 = vector.broadcast %76 : vector<4x1xf32> to vector<4x32xf32>
    %78 = arith.subf %72, %77 : vector<4x32xf32>
    %79 = arith.mulf %78, %78 : vector<4x32xf32>
    %cst_24 = arith.constant dense<0.000000e+00> : vector<4xf32>
    %80 = vector.multi_reduction <add>, %79, %cst_24 [1] : vector<4x32xf32> to vector<4xf32>
    %81 = vector.shape_cast %80 : vector<4xf32> to vector<4x1xf32>
    %cst_25 = arith.constant 0.0322580636 : f32
    %82 = vector.broadcast %cst_25 : f32 to vector<4x1xf32>
    %83 = arith.mulf %81, %82 : vector<4x1xf32>
    %84 = math.sqrt %83 : vector<4x1xf32>
    %cst_26 = arith.constant 9.99999974E-6 : f32
    %85 = vector.broadcast %cst_26 : f32 to vector<4x1xf32>
    %86 = arith.addf %84, %85 : vector<4x1xf32>
    %cst_27 = arith.constant 1.000000e+00 : f32
    %87 = vector.broadcast %cst_27 : f32 to vector<4x1xf32>
    %88 = arith.divf %87, %86 : vector<4x1xf32>
    %89 = vector.broadcast %88 : vector<4x1xf32> to vector<4x32xf32>
    %90 = arith.mulf %78, %89 : vector<4x32xf32>
    %91 = vector.broadcast %1 : vector<1x32xf32> to vector<4x32xf32>
    %92 = arith.mulf %90, %91 : vector<4x32xf32>
    %93 = vector.broadcast %2 : vector<1x32xf32> to vector<4x32xf32>
    %94 = arith.addf %92, %93 : vector<4x32xf32>
    %95 = tpu.concatenate %25, %48, %71, %94 in 1 : vector<4x32xf32>, vector<4x32xf32>, vector<4x32xf32>, vector<4x32xf32> -> vector<4x128xf32>
    %c0_28 = arith.constant 0 : index
    %c0_29 = arith.constant 0 : index
    %96 = vector.load %arg4[%c0_28, %c0_29] : memref<4x128xf32, #tpu.memory_space<vmem>>, vector<4x128xf32>
    tpu.vector_store %arg4[%c0_28, %c0_29], %95 {strides = array<i32>} : memref<4x128xf32, #tpu.memory_space<vmem>>, vector<4x128xf32>,
    return
  }
  func.func @transform_0(%arg0: i32) -> (i32, i32) {
    %c0_i32 = arith.constant 0 : i32
    %c0_i32_0 = arith.constant 0 : i32
    return %arg0, %c0_i32 : i32, i32
  }
  func.func @transform_1(%arg0: i32) -> (i32, i32) {
    %c0_i32 = arith.constant 0 : i32
    %c0_i32_0 = arith.constant 0 : i32
    %c0_i32_1 = arith.constant 0 : i32
    return %c0_i32, %c0_i32_0 : i32, i32
  }
  func.func @transform_2(%arg0: i32) -> (i32, i32) {
    %c0_i32 = arith.constant 0 : i32
    %c0_i32_0 = arith.constant 0 : i32
    %c0_i32_1 = arith.constant 0 : i32
    return %c0_i32, %c0_i32_0 : i32, i32
  }
  func.func @transform_3(%arg0: i32) -> (i32, i32) {
    %c0_i32 = arith.constant 0 : i32
    %c0_i32_0 = arith.constant 0 : i32
    return %arg0, %c0_i32 : i32, i32
  }
}

</mosaic_0001>

<llo_original>
// kernel: tpu_custom_call.1
$region0: #{tpu_custom_call.1}
  #allocation0 [shape = 'u32[]', space=smem, size = 0x4, offset = 0x4, fixed_abs, tag = 'smem constant byte address 0x4 - core index']
  #allocation1 [shape = 'u32[144,128]{1,0:T(1,128)}', space=vmem, size = 0x12000, scoped, tag = 'internal scratch']
  %s0 = inlined_call_operand.hbm [shape: f32[4,128], index: 0, kind: input, shape index: {}]
  %s1 = inlined_call_operand.vmem [shape: f32[1,32], index: 1, kind: input, shape index: {}]
  %s2 = inlined_call_operand.vmem [shape: f32[1,32], index: 2, kind: input, shape index: {}]
  %s3 = inlined_call_operand.hbm [shape: f32[4,128], index: 3, kind: output, shape index: {}]
  %s4 = sld [smem:[#allocation0]]
  $region26: #{tpu_custom_call.1} parent=0
    _
  %s6 = ssub.s32 1, %s4
  %s7 = scalar_select 0, %s6, %s4
  $region1: #{tpu_custom_call.1} parent=0
    #allocation2 [shape = 'u8[2048]{0}', space=vmem, size = 0x800, scoped, tag = 'input window, operand 0, single buffered']
    #allocation3 [shape = 's32[1]{0}', space=sflag, size = 0x4, scoped, tag = 'scoped memory for tpu_custom_call.1']
    #allocation4 [shape = 's32[1]{0}', space=sflag, size = 0x4, scoped, tag = 'scoped memory for tpu_custom_call.1']
    #allocation5 [shape = 'u8[2048]{0}', space=vmem, size = 0x800, scoped, tag = 'output window, operand 0, single buffered']
    %8 = vsyncpa [#allocation3], 0
    %9 = vsyncpa [#allocation4], 0
    // Predicated region
    $region2: #{tpu_custom_call.1} parent=1 // pred_check
      _
    $region3: #{tpu_custom_call.1} parent=1 // pred_check_branch
      %11 = sbr.rel (0) target = $region5
    $region4: #{tpu_custom_call.1} parent=1 // pred_region
      %s13 = ssub.s32 64, 64
      %14 = vsyncadd [#allocation3], %s13
      %s16 = sshll.u32 [#allocation2], 4
      %s17 = int_to_ptr.vmem [resolvable:$true] %s16
      %19 = dma.hbm_to_vmem [thread:$0]  %s0, 64, %s17, [#allocation3]
    $region5: #{tpu_custom_call.1} parent=1 // pred_fallthru
      _
    // Predicated region
    $region6: #{tpu_custom_call.1} parent=1 // pred_check
      _
    $region7: #{tpu_custom_call.1} parent=1 // pred_check_branch
      %21 = sbr.rel (0) target = $region9
    $region8: #{tpu_custom_call.1} parent=1 // pred_region
      _
    $region9: #{tpu_custom_call.1} parent=1 // pred_fallthru
      _
    // Predicated region
    $region10: #{tpu_custom_call.1} parent=1 // pred_check
      _
    $region11: #{tpu_custom_call.1} parent=1 // pred_check_branch
      %23 = sbr.rel (0) target = $region13
    $region12: #{tpu_custom_call.1} parent=1 // pred_region
      _
    $region13: #{tpu_custom_call.1} parent=1 // pred_fallthru
      _
    // Predicated region
    $region14: #{tpu_custom_call.1} parent=1 // pred_check
      _
    $region15: #{tpu_custom_call.1} parent=1 // pred_check_branch
      %25 = sbr.rel (0) target = $region17
    $region16: #{tpu_custom_call.1} parent=1 // pred_region
      %26 = dma.done [#allocation3], 64
    $region17: #{tpu_custom_call.1} parent=1 // pred_fallthru
      _
    %v27 = vld [vmem:[#allocation2] sm:$0xf]
    %v28 = vld [vmem:[%s1] sm:$0x1]
    %v29 = vld [vmem:[%s2] sm:$0x1]
    %vm30 = vcmask 257024
    %v31 = vsel %vm30, %v27, 0.0
    %32 = vadd.xlane.f32.xlu0 %v31
    %v33 = vpop.xlane.xlu0 %32
    %v34 = vrcp.pop 32.0
    %v35 = vmul.f32 %v33, %v34
    %v36 = vsub.f32 %v27, %v35
    %v37 = vmul.f32 %v36, %v36
    %v38 = vsel %vm30, %v37, 0.0
    %39 = vadd.xlane.f32.xlu0 %v38
    %v40 = vpop.xlane.xlu0 %39
    %v41 = vmul.f32 %v40, 0.032258064
    %v42 = vrsqrt.pop %v41
    %v43 = vmul.f32 %v41, %v42
    %vm44 = vcmp.eq.f32.partialorder %v41, inf
    %v45 = vsel %vm44, %v41, %v43
    %vm46 = vcmp.eq.f32.partialorder %v41, 0.0
    %v47 = vand.u32 %v41, 2147483648
    %v48 = vsel %vm46, %v47, %v45
    %v49 = vadd.f32 %v48, 1e-05
    %v50 = vrcp.pop %v49
    %v51 = vmul.f32 1.0, %v50
    %v52 = vmul.f32 %v36, %v51
    %v54 = vlaneseq
    %v55 = vshrl.u32 %v54, 7
    %v56 = vsub.s32 0, %v55
    %v57 = vrot.slane %v28, %v56
    %v59 = vmul.f32 %v52, %v57
    %v61 = vlaneseq
    %v62 = vshrl.u32 %v61, 7
    %v63 = vsub.s32 0, %v62
    %v64 = vrot.slane %v29, %v63
    %v66 = vadd.f32 %v59, %v64
    %68 = vrot.lane.b32.xlu0 %v27, 96
    %v69 = vpop.permute.xlu0 %68
    %v71 = vsel %vm30, %v69, 0.0
    %72 = vadd.xlane.f32.xlu0 %v71
    %v73 = vpop.xlane.xlu0 %72
    %v74 = vmul.f32 %v73, %v34
    %v75 = vsub.f32 %v27, %v74
    %v76 = vmul.f32 %v75, %v75
    %78 = vrot.lane.b32.xlu0 %v76, 96
    %v79 = vpop.permute.xlu0 %78
    %v81 = vsel %vm30, %v79, 0.0
    %82 = vadd.xlane.f32.xlu0 %v81
    %v83 = vpop.xlane.xlu0 %82
    %v84 = vmul.f32 %v83, 0.032258064
    %v85 = vrsqrt.pop %v84
    %v86 = vmul.f32 %v84, %v85
    %vm87 = vcmp.eq.f32.partialorder %v84, inf
    %v88 = vsel %vm87, %v84, %v86
    %vm89 = vcmp.eq.f32.partialorder %v84, 0.0
    %v90 = vand.u32 %v84, 2147483648
    %v91 = vsel %vm89, %v90, %v88
    %v92 = vadd.f32 %v91, 1e-05
    %v93 = vrcp.pop %v92
    %v94 = vmul.f32 1.0, %v93
    %v95 = vmul.f32 %v75, %v94
    %96 = vrot.lane.b32.xlu0 %v57, 32
    %v97 = vpop.permute.xlu0 %96
    %v99 = vmul.f32 %v95, %v97
    %100 = vrot.lane.b32.xlu0 %v64, 32
    %v101 = vpop.permute.xlu0 %100
    %v103 = vadd.f32 %v99, %v101
    %104 = vrot.lane.b32.xlu0 %v27, 64
    %v105 = vpop.permute.xlu0 %104
    %v107 = vsel %vm30, %v105, 0.0
    %108 = vadd.xlane.f32.xlu0 %v107
    %v109 = vpop.xlane.xlu0 %108
    %v110 = vmul.f32 %v109, %v34
    %v111 = vsub.f32 %v27, %v110
    %v112 = vmul.f32 %v111, %v111
    %114 = vrot.lane.b32.xlu0 %v112, 64
    %v115 = vpop.permute.xlu0 %114
    %v117 = vsel %vm30, %v115, 0.0
    %118 = vadd.xlane.f32.xlu0 %v117
    %v119 = vpop.xlane.xlu0 %118
    %v120 = vmul.f32 %v119, 0.032258064
    %v121 = vrsqrt.pop %v120
    %v122 = vmul.f32 %v120, %v121
    %vm123 = vcmp.eq.f32.partialorder %v120, inf
    %v124 = vsel %vm123, %v120, %v122
    %vm125 = vcmp.eq.f32.partialorder %v120, 0.0
    %v126 = vand.u32 %v120, 2147483648
    %v127 = vsel %vm125, %v126, %v124
    %v128 = vadd.f32 %v127, 1e-05
    %v129 = vrcp.pop %v128
    %v130 = vmul.f32 1.0, %v129
    %v131 = vmul.f32 %v111, %v130
    %132 = vrot.lane.b32.xlu0 %v57, 64
    %v133 = vpop.permute.xlu0 %132
    %v135 = vmul.f32 %v131, %v133
    %136 = vrot.lane.b32.xlu0 %v64, 64
    %v137 = vpop.permute.xlu0 %136
    %v139 = vadd.f32 %v135, %v137
    %140 = vrot.lane.b32.xlu0 %v27, 32
    %v141 = vpop.permute.xlu0 %140
    %v143 = vsel %vm30, %v141, 0.0
    %144 = vadd.xlane.f32.xlu0 %v143
    %v145 = vpop.xlane.xlu0 %144
    %v146 = vmul.f32 %v145, %v34
    %v147 = vsub.f32 %v27, %v146
    %v148 = vmul.f32 %v147, %v147
    %150 = vrot.lane.b32.xlu0 %v148, 32
    %v151 = vpop.permute.xlu0 %150
    %v153 = vsel %vm30, %v151, 0.0
    %154 = vadd.xlane.f32.xlu0 %v153
    %v155 = vpop.xlane.xlu0 %154
    %v156 = vmul.f32 %v155, 0.032258064
    %v157 = vrsqrt.pop %v156
    %v158 = vmul.f32 %v156, %v157
    %vm159 = vcmp.eq.f32.partialorder %v156, inf
    %v160 = vsel %vm159, %v156, %v158
    %vm161 = vcmp.eq.f32.partialorder %v156, 0.0
    %v162 = vand.u32 %v156, 2147483648
    %v163 = vsel %vm161, %v162, %v160
    %v164 = vadd.f32 %v163, 1e-05
    %v165 = vrcp.pop %v164
    %v166 = vmul.f32 1.0, %v165
    %v167 = vmul.f32 %v147, %v166
    %168 = vrot.lane.b32.xlu0 %v57, 96
    %v169 = vpop.permute.xlu0 %168
    %v171 = vmul.f32 %v167, %v169
    %172 = vrot.lane.b32.xlu0 %v64, 96
    %v173 = vpop.permute.xlu0 %172
    %v175 = vadd.f32 %v171, %v173
    %vm176 = vcmask 261120
    %v177 = vsel %vm176, %v66, %v103
    %vm178 = vcmask 523264
    %v179 = vsel %vm178, %v177, %v139
    %vm180 = vcmask 785408
    %v181 = vsel %vm180, %v179, %v175
    %182 = vst [vmem:[#allocation5] sm:$0xf] %v181
    // Predicated region
    $region18: #{tpu_custom_call.1} parent=1 // pred_check
      _
    $region19: #{tpu_custom_call.1} parent=1 // pred_check_branch
      %184 = sbr.rel (0) target = $region21
    $region20: #{tpu_custom_call.1} parent=1 // pred_region
      %s186 = ssub.s32 64, 64
      %187 = vsyncadd [#allocation4], %s186
      %s189 = sshll.u32 [#allocation5], 4
      %s190 = int_to_ptr.vmem [resolvable:$true] %s189
      %192 = dma.vmem_to_hbm [thread:$0]  %s190, 64, %s3, [#allocation4]
    $region21: #{tpu_custom_call.1} parent=1 // pred_fallthru
      _
    // Predicated region
    $region22: #{tpu_custom_call.1} parent=1 // pred_check
      _
    $region23: #{tpu_custom_call.1} parent=1 // pred_check_branch
      %194 = sbr.rel (0) target = $region25
    $region24: #{tpu_custom_call.1} parent=1 // pred_region
      %195 = dma.done [#allocation4], 64
    $region25: #{tpu_custom_call.1} parent=1 // pred_fallthru
      _
    %196 = vsyncpa [#allocation3], 1
    %197 = vsyncpa [#allocation4], 1

</llo_original>
